<compile_context>
chip_gen: v6e
topology: v6e:2x2x1
jax: 0.10.0
libtpu: 0.0.40
codegen_flags: <defaults>
</compile_context>

<pallas_src>
import functools
import numpy as np
import jax
import jax.numpy as jnp
from jax.experimental import pallas as pl
from jax.experimental.pallas import tpu as pltpu

# ----------------------------- configuration -----------------------------
B = 2                  # batch
CIN = 4                # input_dim
CH = 32                # hidden_dim
K = 3                  # kernel_size
PAD = K // 2
H = W = 16             # spatial size
CT = CIN + CH          # channels of cat([x, h])
KKCT = K * K * CT      # raw im2col contraction size (324)
KKCT_P = 384           # padded contraction: bias row + zero pad, 3 MXU passes
G4 = 4 * CH            # gate channels (i | f | o | g) = 128
NTOT = B * H * W       # folded batch*spatial lane dimension = 512


# ----------------------------- Pallas kernel -----------------------------
def _sigmoid(x):
    # exact sigmoid via tanh -> runs on the EUP (transcendental slot)
    return 0.5 * jnp.tanh(0.5 * x) + 0.5


def _convlstm_kernel(w_ref, p_ref, c_ref, hc_ref, *, ch):
    # w_ref : (4*CH, KKCT_P)  bf16  packed conv weight, bias folded in col 324
    # p_ref : (KKCT_P, NTOT)  bf16  im2col patches, ones-row at 324, zero pad
    # c_ref : (CH, NTOT)      f32   current cell state (channel-major)
    # hc_ref: (2*CH, NTOT)    f32   output: [h_next ; c_next] stacked on sublanes
    gates = jnp.dot(w_ref[...], p_ref[...],
                    preferred_element_type=jnp.float32)      # (128, NTOT) f32
    i = _sigmoid(gates[0 * ch:1 * ch, :])
    f = _sigmoid(gates[1 * ch:2 * ch, :])
    o = _sigmoid(gates[2 * ch:3 * ch, :])
    g = jnp.tanh(gates[3 * ch:4 * ch, :])
    c_next = f * c_ref[...] + i * g
    h_next = o * jnp.tanh(c_next)
    hc_ref[0:ch, :] = h_next          # direct sublane-slice stores, no concat
    hc_ref[ch:2 * ch, :] = c_next


# ----------------------------- wrapper -----------------------------
@jax.jit
def convlstm_cell_forward(x, h_cur, c_cur, w_conv, b_conv):
    """x: (B, CIN, H, W); h_cur, c_cur: (B, CH, H, W)
    w_conv: (4*CH, CIN+CH, K, K) PyTorch OIHW; b_conv: (4*CH,)
    Returns (h_next, c_next), both (B, CH, H, W) float32."""
    Bx, _, Hx, Wx = x.shape
    n = Bx * Hx * Wx

    # ---- layout plumbing (tiny XLA ops, fused under jit) ----
    comb = jnp.concatenate([x, h_cur], axis=1)                 # (B, CT, H, W)
    comb_t = jnp.transpose(comb, (1, 0, 2, 3))                 # (CT, B, H, W)
    comb_p = jnp.pad(comb_t, ((0, 0), (0, 0), (PAD, PAD), (PAD, PAD)))

    # im2col, channels on sublanes / (batch,spatial) on lanes:
    # row index = (dy*K + dx)*CT + cin ; col index = b*H*W + y*W + x
    taps = [comb_p[:, :, dy:dy + Hx, dx:dx + Wx]
            for dy in range(K) for dx in range(K)]
    patches = jnp.concatenate(taps, axis=0).reshape(KKCT, n)
    patches = jnp.concatenate(
        [patches,
         jnp.ones((1, n), jnp.float32),                        # bias row
         jnp.zeros((KKCT_P - KKCT - 1, n), jnp.float32)],      # zero pad to 384
        axis=0).astype(jnp.bfloat16)

    # pack OIHW weight to match patch rows; fold bias as column 324, pad to 384
    w_mat = jnp.transpose(w_conv, (0, 2, 3, 1)).reshape(G4, KKCT)
    w_aug = jnp.concatenate(
        [w_mat, b_conv[:, None],
         jnp.zeros((G4, KKCT_P - KKCT - 1), jnp.float32)],
        axis=1).astype(jnp.bfloat16)                           # (128, 384)

    c_flat = jnp.transpose(c_cur, (1, 0, 2, 3)).reshape(CH, n)  # (CH, n) f32

    kern = functools.partial(_convlstm_kernel, ch=CH)
    hc = pl.pallas_call(
        kern,
        out_shape=jax.ShapeDtypeStruct((2 * CH, n), jnp.float32),
        grid=(1,),                         # batch folded -> single grid step
        in_specs=[
            pl.BlockSpec((G4, KKCT_P), lambda i: (0, 0)),
            pl.BlockSpec((KKCT_P, n), lambda i: (0, 0)),
            pl.BlockSpec((CH, n), lambda i: (0, 0)),
        ],
        out_specs=pl.BlockSpec((2 * CH, n), lambda i: (0, 0)),
        compiler_params=pltpu.CompilerParams(
            dimension_semantics=("arbitrary",)),
    )(w_aug, patches, c_flat)

    # (2*CH, B*H*W) -> (B, 2*CH, H, W); already channel-major, single transpose
    hc = jnp.transpose(hc.reshape(2 * CH, Bx, Hx, Wx), (1, 0, 2, 3))
    return hc[:, :CH], hc[:, CH:]


# ----------------------------- pure-JAX reference (self-check) ----------------
def reference_convlstm(x, h_cur, c_cur, w_conv, b_conv):
    comb = jnp.concatenate([x, h_cur], axis=1)
    gates = jax.lax.conv_general_dilated(
        comb, w_conv, window_strides=(1, 1), padding="SAME",
        dimension_numbers=("NCHW", "OIHW", "NCHW"),
        precision=jax.lax.Precision.HIGHEST)
    gates = gates + b_conv[None, :, None, None]
    cc_i, cc_f, cc_o, cc_g = jnp.split(gates, 4, axis=1)
    i = jax.nn.sigmoid(cc_i)
    f = jax.nn.sigmoid(cc_f)
    o = jax.nn.sigmoid(cc_o)
    g = jnp.tanh(cc_g)
    c_next = f * c_cur + i * g
    h_next = o * jnp.tanh(c_next)
    return h_next, c_next


# ----------------------------- main -----------------------------
if __name__ == "__main__":
    key = jax.random.PRNGKey(0)
    kx, kh, kc, kw, kb = jax.random.split(key, 5)
    x = jax.random.normal(kx, (B, CIN, H, W), jnp.float32)
    h_cur = jax.random.normal(kh, (B, CH, H, W), jnp.float32)
    c_cur = jax.random.normal(kc, (B, CH, H, W), jnp.float32)

    # PyTorch-style Conv2d init scale
    bound = 1.0 / np.sqrt(CT * K * K)
    w_conv = jax.random.uniform(kw, (G4, CT, K, K), jnp.float32, -bound, bound)
    b_conv = jax.random.uniform(kb, (G4,), jnp.float32, -bound, bound)

    h_next, c_next = convlstm_cell_forward(x, h_cur, c_cur, w_conv, b_conv)
    (h_next, c_next) = jax.block_until_ready((h_next, c_next))

    assert h_next.shape == (B, CH, H, W) and c_next.shape == (B, CH, H, W)
    assert h_next.dtype == jnp.float32 and c_next.dtype == jnp.float32

    h_exp, c_exp = jax.block_until_ready(
        reference_convlstm(x, h_cur, c_cur, w_conv, b_conv))
    err = max(float(jnp.max(jnp.abs(h_next - h_exp))),
              float(jnp.max(jnp.abs(c_next - c_exp))))
    # bf16 matmul operands (f32 accumulation) -> allow up to 2e-2 abs error
    # against the f32 HIGHEST-precision reference.
    assert np.isfinite(err) and err < 2e-2, f"max abs err {err}"
    print("KERNEL_OK")
</pallas_src>

<mosaic_0001>
module attributes {stable_mosaic.version = 11 : i64} {
  func.func @_convlstm_kernel(%arg0: i32, %arg1: memref<128x384xbf16, #tpu.memory_space<vmem>>, %arg2: memref<384x512xbf16, #tpu.memory_space<vmem>>, %arg3: memref<32x512xf32, #tpu.memory_space<vmem>>, %arg4: memref<64x512xf32, #tpu.memory_space<vmem>>) attributes {dimension_semantics = [#tpu.dimension_semantics<arbitrary>], iteration_bounds = array<i64: 1>, scalar_prefetch = 0 : i64, scratch_operands = 0 : i64, tpu.core_type = #tpu.core_type<tc>, window_params = [{pipeline_mode = #tpu.pipeline_mode<synchronous>, transform_indices = @transform_0, window_bounds = array<i64: 128, 384>}, {pipeline_mode = #tpu.pipeline_mode<synchronous>, transform_indices = @transform_1, window_bounds = array<i64: 384, 512>}, {pipeline_mode = #tpu.pipeline_mode<synchronous>, transform_indices = @transform_2, window_bounds = array<i64: 32, 512>}, {pipeline_mode = #tpu.pipeline_mode<synchronous>, transform_indices = @transform_3, window_bounds = array<i64: 64, 512>}]} {
    %c0 = arith.constant 0 : index
    %c0_0 = arith.constant 0 : index
    %0 = vector.load %arg1[%c0, %c0_0] : memref<128x384xbf16, #tpu.memory_space<vmem>>, vector<128x384xbf16>
    %c0_1 = arith.constant 0 : index
    %c0_2 = arith.constant 0 : index
    %1 = vector.load %arg2[%c0_1, %c0_2] : memref<384x512xbf16, #tpu.memory_space<vmem>>, vector<384x512xbf16>
    %cst = arith.constant dense<0.000000e+00> : vector<128x512xf32>
    %2 = tpu.matmul %0, %1, %cst {dimension_numbers = #tpu.dot_dimension_numbers<[1], [0], [0], [1], [0, 0, 1, 1], [], []>} : vector<128x384xbf16>, vector<384x512xbf16>, vector<128x512xf32> -> vector<128x512xf32>
    %3 = vector.extract_strided_slice %2 {offsets = [0, 0], sizes = [32, 512], strides = [1, 1]} : vector<128x512xf32> to vector<32x512xf32>
    %cst_3 = arith.constant 5.000000e-01 : f32
    %4 = vector.broadcast %cst_3 : f32 to vector<32x512xf32>
    %5 = arith.mulf %4, %3 : vector<32x512xf32>
    %6 = math.tanh %5 : vector<32x512xf32>
    %cst_4 = arith.constant 5.000000e-01 : f32
    %7 = vector.broadcast %cst_4 : f32 to vector<32x512xf32>
    %8 = arith.mulf %7, %6 : vector<32x512xf32>
    %cst_5 = arith.constant 5.000000e-01 : f32
    %9 = vector.broadcast %cst_5 : f32 to vector<32x512xf32>
    %10 = arith.addf %8, %9 : vector<32x512xf32>
    %11 = vector.extract_strided_slice %2 {offsets = [32, 0], sizes = [32, 512], strides = [1, 1]} : vector<128x512xf32> to vector<32x512xf32>
    %cst_6 = arith.constant 5.000000e-01 : f32
    %12 = vector.broadcast %cst_6 : f32 to vector<32x512xf32>
    %13 = arith.mulf %12, %11 : vector<32x512xf32>
    %14 = math.tanh %13 : vector<32x512xf32>
    %cst_7 = arith.constant 5.000000e-01 : f32
    %15 = vector.broadcast %cst_7 : f32 to vector<32x512xf32>
    %16 = arith.mulf %15, %14 : vector<32x512xf32>
    %cst_8 = arith.constant 5.000000e-01 : f32
    %17 = vector.broadcast %cst_8 : f32 to vector<32x512xf32>
    %18 = arith.addf %16, %17 : vector<32x512xf32>
    %19 = vector.extract_strided_slice %2 {offsets = [64, 0], sizes = [32, 512], strides = [1, 1]} : vector<128x512xf32> to vector<32x512xf32>
    %cst_9 = arith.constant 5.000000e-01 : f32
    %20 = vector.broadcast %cst_9 : f32 to vector<32x512xf32>
    %21 = arith.mulf %20, %19 : vector<32x512xf32>
    %22 = math.tanh %21 : vector<32x512xf32>
    %cst_10 = arith.constant 5.000000e-01 : f32
    %23 = vector.broadcast %cst_10 : f32 to vector<32x512xf32>
    %24 = arith.mulf %23, %22 : vector<32x512xf32>
    %cst_11 = arith.constant 5.000000e-01 : f32
    %25 = vector.broadcast %cst_11 : f32 to vector<32x512xf32>
    %26 = arith.addf %24, %25 : vector<32x512xf32>
    %27 = vector.extract_strided_slice %2 {offsets = [96, 0], sizes = [32, 512], strides = [1, 1]} : vector<128x512xf32> to vector<32x512xf32>
    %28 = math.tanh %27 : vector<32x512xf32>
    %c0_12 = arith.constant 0 : index
    %c0_13 = arith.constant 0 : index
    %29 = vector.load %arg3[%c0_12, %c0_13] : memref<32x512xf32, #tpu.memory_space<vmem>>, vector<32x512xf32>
    %30 = arith.mulf %18, %29 : vector<32x512xf32>
    %31 = arith.mulf %10, %28 : vector<32x512xf32>
    %32 = arith.addf %30, %31 : vector<32x512xf32>
    %33 = math.tanh %32 : vector<32x512xf32>
    %34 = arith.mulf %26, %33 : vector<32x512xf32>
    %c0_14 = arith.constant 0 : index
    %c0_15 = arith.constant 0 : index
    %35 = vector.load %arg4[%c0_14, %c0_15] : memref<64x512xf32, #tpu.memory_space<vmem>>, vector<32x512xf32>
    tpu.vector_store %arg4[%c0_14, %c0_15], %34 {strides = array<i32>} : memref<64x512xf32, #tpu.memory_space<vmem>>, vector<32x512xf32>,
    %c32 = arith.constant 32 : index
    %c0_16 = arith.constant 0 : index
    %36 = vector.load %arg4[%c32, %c0_16] : memref<64x512xf32, #tpu.memory_space<vmem>>, vector<32x512xf32>
    tpu.vector_store %arg4[%c32, %c0_16], %32 {strides = array<i32>} : memref<64x512xf32, #tpu.memory_space<vmem>>, vector<32x512xf32>,
    return
  }
  func.func @transform_0(%arg0: i32) -> (i32, i32) {
    %c0_i32 = arith.constant 0 : i32
    %c0_i32_0 = arith.constant 0 : i32
    %c0_i32_1 = arith.constant 0 : i32
    return %c0_i32, %c0_i32_0 : i32, i32
  }
  func.func @transform_1(%arg0: i32) -> (i32, i32) {
    %c0_i32 = arith.constant 0 : i32
    %c0_i32_0 = arith.constant 0 : i32
    %c0_i32_1 = arith.constant 0 : i32
    return %c0_i32, %c0_i32_0 : i32, i32
  }
  func.func @transform_2(%arg0: i32) -> (i32, i32) {
    %c0_i32 = arith.constant 0 : i32
    %c0_i32_0 = arith.constant 0 : i32
    %c0_i32_1 = arith.constant 0 : i32
    return %c0_i32, %c0_i32_0 : i32, i32
  }
  func.func @transform_3(%arg0: i32) -> (i32, i32) {
    %c0_i32 = arith.constant 0 : i32
    %c0_i32_0 = arith.constant 0 : i32
    %c0_i32_1 = arith.constant 0 : i32
    return %c0_i32, %c0_i32_0 : i32, i32
  }
}

</mosaic_0001>

<llo_original>
// kernel: convlstm_cell_forward.1
$region0: #{convlstm_cell_forward.1}
  #allocation0 [shape = 'u32[]', space=smem, size = 0x4, offset = 0x4, fixed_abs, tag = 'smem constant byte address 0x4 - core index']
  #allocation1 [shape = 'u32[144,128]{1,0:T(1,128)}', space=vmem, size = 0x12000, scoped, tag = 'internal scratch']
  %s0 = inlined_call_operand.vmem [shape: bf16[128,384], index: 0, kind: input, shape index: {}]
  %s1 = inlined_call_operand.vmem [shape: bf16[384,512], index: 1, kind: input, shape index: {}]
  %s2 = inlined_call_operand.vmem [shape: f32[32,512], index: 2, kind: input, shape index: {}]
  %s3 = inlined_call_operand.vmem [shape: f32[64,512], index: 3, kind: output, shape index: {}]
  %s4 = sld [smem:[#allocation0]]
  $region22: #{convlstm_cell_forward.1} parent=0
    _
  %s6 = ssub.s32 1, %s4
  %s7 = scalar_select 0, %s6, %s4
  // Predicated region
  $region2: #{convlstm_cell_forward.1} parent=0 // pred_check
    _
  $region3: #{convlstm_cell_forward.1} parent=0 // pred_check_branch
    %9 = sbr.rel (0) target = $region5
  $region4: #{convlstm_cell_forward.1} parent=0 // pred_region
    _
  $region5: #{convlstm_cell_forward.1} parent=0 // pred_fallthru
    _
  // Predicated region
  $region6: #{convlstm_cell_forward.1} parent=0 // pred_check
    _
  $region7: #{convlstm_cell_forward.1} parent=0 // pred_check_branch
    %11 = sbr.rel (0) target = $region9
  $region8: #{convlstm_cell_forward.1} parent=0 // pred_region
    _
  $region9: #{convlstm_cell_forward.1} parent=0 // pred_fallthru
    _
  // Predicated region
  $region10: #{convlstm_cell_forward.1} parent=0 // pred_check
    _
  $region11: #{convlstm_cell_forward.1} parent=0 // pred_check_branch
    %13 = sbr.rel (0) target = $region13
  $region12: #{convlstm_cell_forward.1} parent=0 // pred_region
    _
  $region13: #{convlstm_cell_forward.1} parent=0 // pred_fallthru
    _
  %v15 = vld [vmem:[%s0] sm:$0xff]
  %v16 = vld [vmem:[%s0 + $0x8] sm:$0xf]
  %v17 = vld [vmem:[%s0 + $0xc] sm:$0xff]
  %v18 = vld [vmem:[%s0 + $0x14] sm:$0xf]
  %v19 = vld [vmem:[%s0 + $0x18] sm:$0xff]
  %v20 = vld [vmem:[%s0 + $0x20] sm:$0xf]
  %v21 = vld [vmem:[%s0 + $0x24] sm:$0xff]
  %v22 = vld [vmem:[%s0 + $0x2c] sm:$0xf]
  %v23 = vld [vmem:[%s0 + $0x30] sm:$0xff]
  %v24 = vld [vmem:[%s0 + $0x38] sm:$0xf]
  %v25 = vld [vmem:[%s0 + $0x3c] sm:$0xff]
  %v26 = vld [vmem:[%s0 + $0x44] sm:$0xf]
  %v27 = vld [vmem:[%s0 + $0x48] sm:$0xff]
  %v28 = vld [vmem:[%s0 + $0x50] sm:$0xf]
  %v29 = vld [vmem:[%s0 + $0x54] sm:$0xff]
  %v30 = vld [vmem:[%s0 + $0x5c] sm:$0xf]
  %v31 = vld [vmem:[%s0 + $0x60] sm:$0xff]
  %v32 = vld [vmem:[%s0 + $0x68] sm:$0xf]
  %v33 = vld [vmem:[%s0 + $0x6c] sm:$0xff]
  %v34 = vld [vmem:[%s0 + $0x74] sm:$0xf]
  %v35 = vld [vmem:[%s0 + $0x78] sm:$0xff]
  %v36 = vld [vmem:[%s0 + $0x80] sm:$0xf]
  %v37 = vld [vmem:[%s0 + $0x84] sm:$0xff]
  %v38 = vld [vmem:[%s0 + $0x8c] sm:$0xf]
  %v39 = vld [vmem:[%s0 + $0x90] sm:$0xff]
  %v40 = vld [vmem:[%s0 + $0x98] sm:$0xf]
  %v41 = vld [vmem:[%s0 + $0x9c] sm:$0xff]
  %v42 = vld [vmem:[%s0 + $0xa4] sm:$0xf]
  %v43 = vld [vmem:[%s0 + $0xa8] sm:$0xff]
  %v44 = vld [vmem:[%s0 + $0xb0] sm:$0xf]
  %v45 = vld [vmem:[%s0 + $0xb4] sm:$0xff]
  %v46 = vld [vmem:[%s0 + $0xbc] sm:$0xf]
  %v47 = vld [vmem:[%s1] sm:$0xff]
  %v48 = vld [vmem:[%s1 + $0x8] sm:$0xff]
  %v49 = vld [vmem:[%s1 + $0x10] sm:$0xff]
  %v50 = vld [vmem:[%s1 + $0x18] sm:$0xff]
  %v51 = vld [vmem:[%s1 + $0x20] sm:$0xff]
  %v52 = vld [vmem:[%s1 + $0x28] sm:$0xff]
  %v53 = vld [vmem:[%s1 + $0x30] sm:$0xff]
  %v54 = vld [vmem:[%s1 + $0x38] sm:$0xff]
  %v55 = vld [vmem:[%s1 + $0x40] sm:$0xff]
  %v56 = vld [vmem:[%s1 + $0x48] sm:$0xff]
  %v57 = vld [vmem:[%s1 + $0x50] sm:$0xff]
  %v58 = vld [vmem:[%s1 + $0x58] sm:$0xff]
  %v59 = vld [vmem:[%s1 + $0x60] sm:$0xff]
  %v60 = vld [vmem:[%s1 + $0x68] sm:$0xff]
  %v61 = vld [vmem:[%s1 + $0x70] sm:$0xff]
  %v62 = vld [vmem:[%s1 + $0x78] sm:$0xff]
  %v63 = vld [vmem:[%s1 + $0x80] sm:$0xff]
  %v64 = vld [vmem:[%s1 + $0x88] sm:$0xff]
  %v65 = vld [vmem:[%s1 + $0x90] sm:$0xff]
  %v66 = vld [vmem:[%s1 + $0x98] sm:$0xff]
  %v67 = vld [vmem:[%s1 + $0xa0] sm:$0xff]
  %v68 = vld [vmem:[%s1 + $0xa8] sm:$0xff]
  %v69 = vld [vmem:[%s1 + $0xb0] sm:$0xff]
  %v70 = vld [vmem:[%s1 + $0xb8] sm:$0xff]
  %v71 = vld [vmem:[%s1 + $0xc0] sm:$0xff]
  %v72 = vld [vmem:[%s1 + $0xc8] sm:$0xff]
  %v73 = vld [vmem:[%s1 + $0xd0] sm:$0xff]
  %v74 = vld [vmem:[%s1 + $0xd8] sm:$0xff]
  %v75 = vld [vmem:[%s1 + $0xe0] sm:$0xff]
  %v76 = vld [vmem:[%s1 + $0xe8] sm:$0xff]
  %v77 = vld [vmem:[%s1 + $0xf0] sm:$0xff]
  %v78 = vld [vmem:[%s1 + $0xf8] sm:$0xff]
  %v79 = vld [vmem:[%s1 + $0x100] sm:$0xff]
  %v80 = vld [vmem:[%s1 + $0x108] sm:$0xff]
  %v81 = vld [vmem:[%s1 + $0x110] sm:$0xff]
  %v82 = vld [vmem:[%s1 + $0x118] sm:$0xff]
  %v83 = vld [vmem:[%s1 + $0x120] sm:$0xff]
  %v84 = vld [vmem:[%s1 + $0x128] sm:$0xff]
  %v85 = vld [vmem:[%s1 + $0x130] sm:$0xff]
  %v86 = vld [vmem:[%s1 + $0x138] sm:$0xff]
  %v87 = vld [vmem:[%s1 + $0x140] sm:$0xff]
  %v88 = vld [vmem:[%s1 + $0x148] sm:$0xff]
  %v89 = vld [vmem:[%s1 + $0x150] sm:$0xff]
  %v90 = vld [vmem:[%s1 + $0x158] sm:$0xff]
  %v91 = vld [vmem:[%s1 + $0x160] sm:$0xff]
  %v92 = vld [vmem:[%s1 + $0x168] sm:$0xff]
  %v93 = vld [vmem:[%s1 + $0x170] sm:$0xff]
  %v94 = vld [vmem:[%s1 + $0x178] sm:$0xff]
  %v95 = vld [vmem:[%s1 + $0x180] sm:$0xff]
  %v96 = vld [vmem:[%s1 + $0x188] sm:$0xff]
  %v97 = vld [vmem:[%s1 + $0x190] sm:$0xff]
  %v98 = vld [vmem:[%s1 + $0x198] sm:$0xff]
  %v99 = vld [vmem:[%s1 + $0x1a0] sm:$0xff]
  %v100 = vld [vmem:[%s1 + $0x1a8] sm:$0xff]
  %v101 = vld [vmem:[%s1 + $0x1b0] sm:$0xff]
  %v102 = vld [vmem:[%s1 + $0x1b8] sm:$0xff]
  %v103 = vld [vmem:[%s1 + $0x1c0] sm:$0xff]
  %v104 = vld [vmem:[%s1 + $0x1c8] sm:$0xff]
  %v105 = vld [vmem:[%s1 + $0x1d0] sm:$0xff]
  %v106 = vld [vmem:[%s1 + $0x1d8] sm:$0xff]
  %v107 = vld [vmem:[%s1 + $0x1e0] sm:$0xff]
  %v108 = vld [vmem:[%s1 + $0x1e8] sm:$0xff]
  %v109 = vld [vmem:[%s1 + $0x1f0] sm:$0xff]
  %v110 = vld [vmem:[%s1 + $0x1f8] sm:$0xff]
  %v111 = vld [vmem:[%s1 + $0x200] sm:$0xff]
  %v112 = vld [vmem:[%s1 + $0x208] sm:$0xff]
  %v113 = vld [vmem:[%s1 + $0x210] sm:$0xff]
  %v114 = vld [vmem:[%s1 + $0x218] sm:$0xff]
  %v115 = vld [vmem:[%s1 + $0x220] sm:$0xff]
  %v116 = vld [vmem:[%s1 + $0x228] sm:$0xff]
  %v117 = vld [vmem:[%s1 + $0x230] sm:$0xff]
  %v118 = vld [vmem:[%s1 + $0x238] sm:$0xff]
  %v119 = vld [vmem:[%s1 + $0x240] sm:$0xff]
  %v120 = vld [vmem:[%s1 + $0x248] sm:$0xff]
  %v121 = vld [vmem:[%s1 + $0x250] sm:$0xff]
  %v122 = vld [vmem:[%s1 + $0x258] sm:$0xff]
  %v123 = vld [vmem:[%s1 + $0x260] sm:$0xff]
  %v124 = vld [vmem:[%s1 + $0x268] sm:$0xff]
  %v125 = vld [vmem:[%s1 + $0x270] sm:$0xff]
  %v126 = vld [vmem:[%s1 + $0x278] sm:$0xff]
  %v127 = vld [vmem:[%s1 + $0x280] sm:$0xff]
  %v128 = vld [vmem:[%s1 + $0x288] sm:$0xff]
  %v129 = vld [vmem:[%s1 + $0x290] sm:$0xff]
  %v130 = vld [vmem:[%s1 + $0x298] sm:$0xff]
  %v131 = vld [vmem:[%s1 + $0x2a0] sm:$0xff]
  %v132 = vld [vmem:[%s1 + $0x2a8] sm:$0xff]
  %v133 = vld [vmem:[%s1 + $0x2b0] sm:$0xff]
  %v134 = vld [vmem:[%s1 + $0x2b8] sm:$0xff]
  %v135 = vld [vmem:[%s1 + $0x2c0] sm:$0xff]
  %v136 = vld [vmem:[%s1 + $0x2c8] sm:$0xff]
  %v137 = vld [vmem:[%s1 + $0x2d0] sm:$0xff]
  %v138 = vld [vmem:[%s1 + $0x2d8] sm:$0xff]
  %v139 = vld [vmem:[%s1 + $0x2e0] sm:$0xff]
  %v140 = vld [vmem:[%s1 + $0x2e8] sm:$0xff]
  %v141 = vld [vmem:[%s1 + $0x2f0] sm:$0xff]
  %v142 = vld [vmem:[%s1 + $0x2f8] sm:$0xff]
  %v175 = vunpack.c.l.b16 %v15
  %v176 = vunpack.c.h.b16 %v15
  %v177 = vunpack.c.l.b16 %v16
  %v178 = vunpack.c.l.b16 %v17
  %v179 = vunpack.c.h.b16 %v17
  %v180 = vunpack.c.l.b16 %v18
  %v181 = vunpack.c.l.b16 %v19
  %v182 = vunpack.c.h.b16 %v19
  %v183 = vunpack.c.l.b16 %v20
  %v184 = vunpack.c.l.b16 %v21
  %v185 = vunpack.c.h.b16 %v21
  %v186 = vunpack.c.l.b16 %v22
  %v187 = vunpack.c.l.b16 %v23
  %v188 = vunpack.c.h.b16 %v23
  %v189 = vunpack.c.l.b16 %v24
  %v190 = vunpack.c.l.b16 %v25
  %v191 = vunpack.c.h.b16 %v25
  %v192 = vunpack.c.l.b16 %v26
  %v193 = vunpack.c.l.b16 %v27
  %v194 = vunpack.c.h.b16 %v27
  %v195 = vunpack.c.l.b16 %v28
  %v196 = vunpack.c.l.b16 %v29
  %v197 = vunpack.c.h.b16 %v29
  %v198 = vunpack.c.l.b16 %v30
  %v199 = vunpack.c.l.b16 %v31
  %v200 = vunpack.c.h.b16 %v31
  %v201 = vunpack.c.l.b16 %v32
  %v202 = vunpack.c.l.b16 %v33
  %v203 = vunpack.c.h.b16 %v33
  %v204 = vunpack.c.l.b16 %v34
  %v205 = vunpack.c.l.b16 %v35
  %v206 = vunpack.c.h.b16 %v35
  %v207 = vunpack.c.l.b16 %v36
  %v208 = vunpack.c.l.b16 %v37
  %v209 = vunpack.c.h.b16 %v37
  %v210 = vunpack.c.l.b16 %v38
  %v211 = vunpack.c.l.b16 %v39
  %v212 = vunpack.c.h.b16 %v39
  %v213 = vunpack.c.l.b16 %v40
  %v214 = vunpack.c.l.b16 %v41
  %v215 = vunpack.c.h.b16 %v41
  %v216 = vunpack.c.l.b16 %v42
  %v217 = vunpack.c.l.b16 %v43
  %v218 = vunpack.c.h.b16 %v43
  %v219 = vunpack.c.l.b16 %v44
  %v220 = vunpack.c.l.b16 %v45
  %v221 = vunpack.c.h.b16 %v45
  %v222 = vunpack.c.l.b16 %v46
  %v223 = vpack.c.b16 %v178, %v175
  %v224 = vpack.c.b16 %v179, %v176
  %v225 = vpack.c.b16 %v180, %v177
  %v226 = vpack.c.b16 %v184, %v181
  %v227 = vpack.c.b16 %v185, %v182
  %v228 = vpack.c.b16 %v186, %v183
  %v229 = vpack.c.b16 %v190, %v187
  %v230 = vpack.c.b16 %v191, %v188
  %v231 = vpack.c.b16 %v192, %v189
  %v232 = vpack.c.b16 %v196, %v193
  %v233 = vpack.c.b16 %v197, %v194
  %v234 = vpack.c.b16 %v198, %v195
  %v235 = vpack.c.b16 %v202, %v199
  %v236 = vpack.c.b16 %v203, %v200
  %v237 = vpack.c.b16 %v204, %v201
  %v238 = vpack.c.b16 %v208, %v205
  %v239 = vpack.c.b16 %v209, %v206
  %v240 = vpack.c.b16 %v210, %v207
  %v241 = vpack.c.b16 %v214, %v211
  %v242 = vpack.c.b16 %v215, %v212
  %v243 = vpack.c.b16 %v216, %v213
  %v244 = vpack.c.b16 %v220, %v217
  %v245 = vpack.c.b16 %v221, %v218
  %v246 = vpack.c.b16 %v222, %v219
  %v367 = vunpack.c.l.b16 %v47
  %v368 = vunpack.c.h.b16 %v47
  %v369 = vunpack.c.l.b16 %v48
  %v370 = vunpack.c.h.b16 %v48
  %v371 = vunpack.c.l.b16 %v49
  %v372 = vunpack.c.h.b16 %v49
  %v373 = vunpack.c.l.b16 %v50
  %v374 = vunpack.c.h.b16 %v50
  %v375 = vunpack.c.l.b16 %v51
  %v376 = vunpack.c.h.b16 %v51
  %v377 = vunpack.c.l.b16 %v52
  %v378 = vunpack.c.h.b16 %v52
  %v379 = vunpack.c.l.b16 %v53
  %v380 = vunpack.c.h.b16 %v53
  %v381 = vunpack.c.l.b16 %v54
  %v382 = vunpack.c.h.b16 %v54
  %v383 = vunpack.c.l.b16 %v55
  %v384 = vunpack.c.h.b16 %v55
  %v385 = vunpack.c.l.b16 %v56
  %v386 = vunpack.c.h.b16 %v56
  %v387 = vunpack.c.l.b16 %v57
  %v388 = vunpack.c.h.b16 %v57
  %v389 = vunpack.c.l.b16 %v58
  %v390 = vunpack.c.h.b16 %v58
  %v391 = vunpack.c.l.b16 %v59
  %v392 = vunpack.c.h.b16 %v59
  %v393 = vunpack.c.l.b16 %v60
  %v394 = vunpack.c.h.b16 %v60
  %v395 = vunpack.c.l.b16 %v61
  %v396 = vunpack.c.h.b16 %v61
  %v397 = vunpack.c.l.b16 %v62
  %v398 = vunpack.c.h.b16 %v62
  %v399 = vunpack.c.l.b16 %v63
  %v400 = vunpack.c.h.b16 %v63
  %v401 = vunpack.c.l.b16 %v64
  %v402 = vunpack.c.h.b16 %v64
  %v403 = vunpack.c.l.b16 %v65
  %v404 = vunpack.c.h.b16 %v65
  %v405 = vunpack.c.l.b16 %v66
  %v406 = vunpack.c.h.b16 %v66
  %v407 = vunpack.c.l.b16 %v67
  %v408 = vunpack.c.h.b16 %v67
  %v409 = vunpack.c.l.b16 %v68
  %v410 = vunpack.c.h.b16 %v68
  %v411 = vunpack.c.l.b16 %v69
  %v412 = vunpack.c.h.b16 %v69
  %v413 = vunpack.c.l.b16 %v70
  %v414 = vunpack.c.h.b16 %v70
  %v415 = vunpack.c.l.b16 %v71
  %v416 = vunpack.c.h.b16 %v71
  %v417 = vunpack.c.l.b16 %v72
  %v418 = vunpack.c.h.b16 %v72
  %v419 = vunpack.c.l.b16 %v73
  %v420 = vunpack.c.h.b16 %v73
  %v421 = vunpack.c.l.b16 %v74
  %v422 = vunpack.c.h.b16 %v74
  %v423 = vunpack.c.l.b16 %v75
  %v424 = vunpack.c.h.b16 %v75
  %v425 = vunpack.c.l.b16 %v76
  %v426 = vunpack.c.h.b16 %v76
  %v427 = vunpack.c.l.b16 %v77
  %v428 = vunpack.c.h.b16 %v77
  %v429 = vunpack.c.l.b16 %v78
  %v430 = vunpack.c.h.b16 %v78
  %v431 = vunpack.c.l.b16 %v79
  %v432 = vunpack.c.h.b16 %v79
  %v433 = vunpack.c.l.b16 %v80
  %v434 = vunpack.c.h.b16 %v80
  %v435 = vunpack.c.l.b16 %v81
  %v436 = vunpack.c.h.b16 %v81
  %v437 = vunpack.c.l.b16 %v82
  %v438 = vunpack.c.h.b16 %v82
  %v439 = vunpack.c.l.b16 %v83
  %v440 = vunpack.c.h.b16 %v83
  %v441 = vunpack.c.l.b16 %v84
  %v442 = vunpack.c.h.b16 %v84
  %v443 = vunpack.c.l.b16 %v85
  %v444 = vunpack.c.h.b16 %v85
  %v445 = vunpack.c.l.b16 %v86
  %v446 = vunpack.c.h.b16 %v86
  %v447 = vunpack.c.l.b16 %v87
  %v448 = vunpack.c.h.b16 %v87
  %v449 = vunpack.c.l.b16 %v88
  %v450 = vunpack.c.h.b16 %v88
  %v451 = vunpack.c.l.b16 %v89
  %v452 = vunpack.c.h.b16 %v89
  %v453 = vunpack.c.l.b16 %v90
  %v454 = vunpack.c.h.b16 %v90
  %v455 = vunpack.c.l.b16 %v91
  %v456 = vunpack.c.h.b16 %v91
  %v457 = vunpack.c.l.b16 %v92
  %v458 = vunpack.c.h.b16 %v92
  %v459 = vunpack.c.l.b16 %v93
  %v460 = vunpack.c.h.b16 %v93
  %v461 = vunpack.c.l.b16 %v94
  %v462 = vunpack.c.h.b16 %v94
  %v463 = vunpack.c.l.b16 %v95
  %v464 = vunpack.c.h.b16 %v95
  %v465 = vunpack.c.l.b16 %v96
  %v466 = vunpack.c.h.b16 %v96
  %v467 = vunpack.c.l.b16 %v97
  %v468 = vunpack.c.h.b16 %v97
  %v469 = vunpack.c.l.b16 %v98
  %v470 = vunpack.c.h.b16 %v98
  %v471 = vunpack.c.l.b16 %v99
  %v472 = vunpack.c.h.b16 %v99
  %v473 = vunpack.c.l.b16 %v100
  %v474 = vunpack.c.h.b16 %v100
  %v475 = vunpack.c.l.b16 %v101
  %v476 = vunpack.c.h.b16 %v101
  %v477 = vunpack.c.l.b16 %v102
  %v478 = vunpack.c.h.b16 %v102
  %v479 = vunpack.c.l.b16 %v103
  %v480 = vunpack.c.h.b16 %v103
  %v481 = vunpack.c.l.b16 %v104
  %v482 = vunpack.c.h.b16 %v104
  %v483 = vunpack.c.l.b16 %v105
  %v484 = vunpack.c.h.b16 %v105
  %v485 = vunpack.c.l.b16 %v106
  %v486 = vunpack.c.h.b16 %v106
  %v487 = vunpack.c.l.b16 %v107
  %v488 = vunpack.c.h.b16 %v107
  %v489 = vunpack.c.l.b16 %v108
  %v490 = vunpack.c.h.b16 %v108
  %v491 = vunpack.c.l.b16 %v109
  %v492 = vunpack.c.h.b16 %v109
  %v493 = vunpack.c.l.b16 %v110
  %v494 = vunpack.c.h.b16 %v110
  %v495 = vunpack.c.l.b16 %v111
  %v496 = vunpack.c.h.b16 %v111
  %v497 = vunpack.c.l.b16 %v112
  %v498 = vunpack.c.h.b16 %v112
  %v499 = vunpack.c.l.b16 %v113
  %v500 = vunpack.c.h.b16 %v113
  %v501 = vunpack.c.l.b16 %v114
  %v502 = vunpack.c.h.b16 %v114
  %v503 = vunpack.c.l.b16 %v115
  %v504 = vunpack.c.h.b16 %v115
  %v505 = vunpack.c.l.b16 %v116
  %v506 = vunpack.c.h.b16 %v116
  %v507 = vunpack.c.l.b16 %v117
  %v508 = vunpack.c.h.b16 %v117
  %v509 = vunpack.c.l.b16 %v118
  %v510 = vunpack.c.h.b16 %v118
  %v511 = vunpack.c.l.b16 %v119
  %v512 = vunpack.c.h.b16 %v119
  %v513 = vunpack.c.l.b16 %v120
  %v514 = vunpack.c.h.b16 %v120
  %v515 = vunpack.c.l.b16 %v121
  %v516 = vunpack.c.h.b16 %v121
  %v517 = vunpack.c.l.b16 %v122
  %v518 = vunpack.c.h.b16 %v122
  %v519 = vunpack.c.l.b16 %v123
  %v520 = vunpack.c.h.b16 %v123
  %v521 = vunpack.c.l.b16 %v124
  %v522 = vunpack.c.h.b16 %v124
  %v523 = vunpack.c.l.b16 %v125
  %v524 = vunpack.c.h.b16 %v125
  %v525 = vunpack.c.l.b16 %v126
  %v526 = vunpack.c.h.b16 %v126
  %v527 = vunpack.c.l.b16 %v127
  %v528 = vunpack.c.h.b16 %v127
  %v529 = vunpack.c.l.b16 %v128
  %v530 = vunpack.c.h.b16 %v128
  %v531 = vunpack.c.l.b16 %v129
  %v532 = vunpack.c.h.b16 %v129
  %v533 = vunpack.c.l.b16 %v130
  %v534 = vunpack.c.h.b16 %v130
  %v535 = vunpack.c.l.b16 %v131
  %v536 = vunpack.c.h.b16 %v131
  %v537 = vunpack.c.l.b16 %v132
  %v538 = vunpack.c.h.b16 %v132
  %v539 = vunpack.c.l.b16 %v133
  %v540 = vunpack.c.h.b16 %v133
  %v541 = vunpack.c.l.b16 %v134
  %v542 = vunpack.c.h.b16 %v134
  %v543 = vunpack.c.l.b16 %v135
  %v544 = vunpack.c.h.b16 %v135
  %v545 = vunpack.c.l.b16 %v136
  %v546 = vunpack.c.h.b16 %v136
  %v547 = vunpack.c.l.b16 %v137
  %v548 = vunpack.c.h.b16 %v137
  %v549 = vunpack.c.l.b16 %v138
  %v550 = vunpack.c.h.b16 %v138
  %v551 = vunpack.c.l.b16 %v139
  %v552 = vunpack.c.h.b16 %v139
  %v553 = vunpack.c.l.b16 %v140
  %v554 = vunpack.c.h.b16 %v140
  %v555 = vunpack.c.l.b16 %v141
  %v556 = vunpack.c.h.b16 %v141
  %v557 = vunpack.c.l.b16 %v142
  %v558 = vunpack.c.h.b16 %v142
  %v559 = vpack.c.b16 %v371, %v367
  %v560 = vpack.c.b16 %v372, %v368
  %v561 = vpack.c.b16 %v373, %v369
  %v562 = vpack.c.b16 %v374, %v370
  %v563 = vpack.c.b16 %v379, %v375
  %v564 = vpack.c.b16 %v380, %v376
  %v565 = vpack.c.b16 %v381, %v377
  %v566 = vpack.c.b16 %v382, %v378
  %v567 = vpack.c.b16 %v387, %v383
  %v568 = vpack.c.b16 %v388, %v384
  %v569 = vpack.c.b16 %v389, %v385
  %v570 = vpack.c.b16 %v390, %v386
  %v571 = vpack.c.b16 %v395, %v391
  %v572 = vpack.c.b16 %v396, %v392
  %v573 = vpack.c.b16 %v397, %v393
  %v574 = vpack.c.b16 %v398, %v394
  %v575 = vpack.c.b16 %v403, %v399
  %v576 = vpack.c.b16 %v404, %v400
  %v577 = vpack.c.b16 %v405, %v401
  %v578 = vpack.c.b16 %v406, %v402
  %v579 = vpack.c.b16 %v411, %v407
  %v580 = vpack.c.b16 %v412, %v408
  %v581 = vpack.c.b16 %v413, %v409
  %v582 = vpack.c.b16 %v414, %v410
  %v583 = vpack.c.b16 %v419, %v415
  %v584 = vpack.c.b16 %v420, %v416
  %v585 = vpack.c.b16 %v421, %v417
  %v586 = vpack.c.b16 %v422, %v418
  %v587 = vpack.c.b16 %v427, %v423
  %v588 = vpack.c.b16 %v428, %v424
  %v589 = vpack.c.b16 %v429, %v425
  %v590 = vpack.c.b16 %v430, %v426
  %v591 = vpack.c.b16 %v435, %v431
  %v592 = vpack.c.b16 %v436, %v432
  %v593 = vpack.c.b16 %v437, %v433
  %v594 = vpack.c.b16 %v438, %v434
  %v595 = vpack.c.b16 %v443, %v439
  %v596 = vpack.c.b16 %v444, %v440
  %v597 = vpack.c.b16 %v445, %v441
  %v598 = vpack.c.b16 %v446, %v442
  %v599 = vpack.c.b16 %v451, %v447
  %v600 = vpack.c.b16 %v452, %v448
  %v601 = vpack.c.b16 %v453, %v449
  %v602 = vpack.c.b16 %v454, %v450
  %v603 = vpack.c.b16 %v459, %v455
  %v604 = vpack.c.b16 %v460, %v456
  %v605 = vpack.c.b16 %v461, %v457
  %v606 = vpack.c.b16 %v462, %v458
  %v607 = vpack.c.b16 %v467, %v463
  %v608 = vpack.c.b16 %v468, %v464
  %v609 = vpack.c.b16 %v469, %v465
  %v610 = vpack.c.b16 %v470, %v466
  %v611 = vpack.c.b16 %v475, %v471
  %v612 = vpack.c.b16 %v476, %v472
  %v613 = vpack.c.b16 %v477, %v473
  %v614 = vpack.c.b16 %v478, %v474
  %v615 = vpack.c.b16 %v483, %v479
  %v616 = vpack.c.b16 %v484, %v480
  %v617 = vpack.c.b16 %v485, %v481
  %v618 = vpack.c.b16 %v486, %v482
  %v619 = vpack.c.b16 %v491, %v487
  %v620 = vpack.c.b16 %v492, %v488
  %v621 = vpack.c.b16 %v493, %v489
  %v622 = vpack.c.b16 %v494, %v490
  %v623 = vpack.c.b16 %v499, %v495
  %v624 = vpack.c.b16 %v500, %v496
  %v625 = vpack.c.b16 %v501, %v497
  %v626 = vpack.c.b16 %v502, %v498
  %v627 = vpack.c.b16 %v507, %v503
  %v628 = vpack.c.b16 %v508, %v504
  %v629 = vpack.c.b16 %v509, %v505
  %v630 = vpack.c.b16 %v510, %v506
  %v631 = vpack.c.b16 %v515, %v511
  %v632 = vpack.c.b16 %v516, %v512
  %v633 = vpack.c.b16 %v517, %v513
  %v634 = vpack.c.b16 %v518, %v514
  %v635 = vpack.c.b16 %v523, %v519
  %v636 = vpack.c.b16 %v524, %v520
  %v637 = vpack.c.b16 %v525, %v521
  %v638 = vpack.c.b16 %v526, %v522
  %v639 = vpack.c.b16 %v531, %v527
  %v640 = vpack.c.b16 %v532, %v528
  %v641 = vpack.c.b16 %v533, %v529
  %v642 = vpack.c.b16 %v534, %v530
  %v643 = vpack.c.b16 %v539, %v535
  %v644 = vpack.c.b16 %v540, %v536
  %v645 = vpack.c.b16 %v541, %v537
  %v646 = vpack.c.b16 %v542, %v538
  %v647 = vpack.c.b16 %v547, %v543
  %v648 = vpack.c.b16 %v548, %v544
  %v649 = vpack.c.b16 %v549, %v545
  %v650 = vpack.c.b16 %v550, %v546
  %v651 = vpack.c.b16 %v555, %v551
  %v652 = vpack.c.b16 %v556, %v552
  %v653 = vpack.c.b16 %v557, %v553
  %v654 = vpack.c.b16 %v558, %v554
  %751 = vmatprep.subr.bf16.mxu0 %v588
  %752 = vmatpush1.bf16.msra.mxu0 %v587
  %753 = vmatprep.subr.bf16.mxu0 %v584
  %754 = vmatpush1.bf16.msra.mxu0 %v583
  %755 = vmatprep.subr.bf16.mxu0 %v580
  %756 = vmatpush1.bf16.msra.mxu0 %v579
  %757 = vmatprep.subr.bf16.mxu0 %v576
  %758 = vmatpush1.bf16.msra.mxu0 %v575
  %759 = vmatprep.subr.bf16.mxu0 %v572
  %760 = vmatpush1.bf16.msra.mxu0 %v571
  %761 = vmatprep.subr.bf16.mxu0 %v568
  %762 = vmatpush1.bf16.msra.mxu0 %v567
  %763 = vmatprep.subr.bf16.mxu0 %v564
  %764 = vmatpush1.bf16.msra.mxu0 %v563
  %765 = vmatprep.subr.bf16.mxu0 %v560
  %766 = vmatpush1.bf16.msra.mxu0 %v559
  %767 = vmatprep.subr.bf16.mxu0 %v620
  %768 = vmatpush2.bf16.msra.mxu0 %v619
  %769 = vmatprep.subr.bf16.mxu0 %v616
  %770 = vmatpush2.bf16.msra.mxu0 %v615
  %771 = vmatprep.subr.bf16.mxu0 %v612
  %772 = vmatpush2.bf16.msra.mxu0 %v611
  %773 = vmatprep.subr.bf16.mxu0 %v608
  %774 = vmatpush2.bf16.msra.mxu0 %v607
  %775 = vmatprep.subr.bf16.mxu0 %v604
  %776 = vmatpush2.bf16.msra.mxu0 %v603
  %777 = vmatprep.subr.bf16.mxu0 %v600
  %778 = vmatpush2.bf16.msra.mxu0 %v599
  %779 = vmatprep.subr.bf16.mxu0 %v596
  %780 = vmatpush2.bf16.msra.mxu0 %v595
  %781 = vmatprep.subr.bf16.mxu0 %v592
  %782 = vmatpush2.bf16.msra.mxu0 %v591
  %783 = vmatprep.mubr.bf16.mxu0 %v224
  %784 = vmatmul.mubr.bf16.gmra.mxu0 %v223
  %v785 = vpop.f32.mrf.mxu0
  %v786 = vadd.f32 0.0, %v785
  %v787 = vpop.f32.mrf.mxu0
  %v788 = vadd.f32 0.0, %v787
  %v789 = vpop.f32.mrf.mxu0
  %v790 = vadd.f32 0.0, %v789
  %v791 = vpop.f32.mrf.mxu0
  %v792 = vadd.f32 0.0, %v791
  %793 = vmatprep.mubr.bf16.mxu0 %v227
  %794 = vmatmul.mubr.bf16.gmra.mxu0 %v226
  %v795 = vpop.f32.mrf.mxu0
  %v796 = vadd.f32 0.0, %v795
  %v797 = vpop.f32.mrf.mxu0
  %v798 = vadd.f32 0.0, %v797
  %v799 = vpop.f32.mrf.mxu0
  %v800 = vadd.f32 0.0, %v799
  %v801 = vpop.f32.mrf.mxu0
  %v802 = vadd.f32 0.0, %v801
  %803 = vmatprep.mubr.bf16.mxu0 %v230
  %804 = vmatmul.mubr.bf16.gmra.mxu0 %v229
  %v805 = vpop.f32.mrf.mxu0
  %v806 = vadd.f32 0.0, %v805
  %v807 = vpop.f32.mrf.mxu0
  %v808 = vadd.f32 0.0, %v807
  %v809 = vpop.f32.mrf.mxu0
  %v810 = vadd.f32 0.0, %v809
  %v811 = vpop.f32.mrf.mxu0
  %v812 = vadd.f32 0.0, %v811
  %813 = vmatprep.mubr.bf16.mxu0 %v233
  %814 = vmatmul.mubr.bf16.gmra.mxu0 %v232
  %v815 = vpop.f32.mrf.mxu0
  %v816 = vadd.f32 0.0, %v815
  %v817 = vpop.f32.mrf.mxu0
  %v818 = vadd.f32 0.0, %v817
  %v819 = vpop.f32.mrf.mxu0
  %v820 = vadd.f32 0.0, %v819
  %v821 = vpop.f32.mrf.mxu0
  %v822 = vadd.f32 0.0, %v821
  %823 = vmatprep.mubr.bf16.mxu0 %v236
  %824 = vmatmul.mubr.bf16.gmra.mxu0 %v235
  %v825 = vpop.f32.mrf.mxu0
  %v826 = vadd.f32 0.0, %v825
  %v827 = vpop.f32.mrf.mxu0
  %v828 = vadd.f32 0.0, %v827
  %v829 = vpop.f32.mrf.mxu0
  %v830 = vadd.f32 0.0, %v829
  %v831 = vpop.f32.mrf.mxu0
  %v832 = vadd.f32 0.0, %v831
  %833 = vmatprep.mubr.bf16.mxu0 %v239
  %834 = vmatmul.mubr.bf16.gmra.mxu0 %v238
  %v835 = vpop.f32.mrf.mxu0
  %v836 = vadd.f32 0.0, %v835
  %v837 = vpop.f32.mrf.mxu0
  %v838 = vadd.f32 0.0, %v837
  %v839 = vpop.f32.mrf.mxu0
  %v840 = vadd.f32 0.0, %v839
  %v841 = vpop.f32.mrf.mxu0
  %v842 = vadd.f32 0.0, %v841
  %843 = vmatprep.mubr.bf16.mxu0 %v242
  %844 = vmatmul.mubr.bf16.gmra.mxu0 %v241
  %v845 = vpop.f32.mrf.mxu0
  %v846 = vadd.f32 0.0, %v845
  %v847 = vpop.f32.mrf.mxu0
  %v848 = vadd.f32 0.0, %v847
  %v849 = vpop.f32.mrf.mxu0
  %v850 = vadd.f32 0.0, %v849
  %v851 = vpop.f32.mrf.mxu0
  %v852 = vadd.f32 0.0, %v851
  %853 = vmatprep.mubr.bf16.mxu0 %v245
  %854 = vmatmul.mubr.bf16.gmra.mxu0 %v244
  %v855 = vpop.f32.mrf.mxu0
  %v856 = vadd.f32 0.0, %v855
  %v857 = vpop.f32.mrf.mxu0
  %v858 = vadd.f32 0.0, %v857
  %v859 = vpop.f32.mrf.mxu0
  %v860 = vadd.f32 0.0, %v859
  %v861 = vpop.f32.mrf.mxu0
  %v862 = vadd.f32 0.0, %v861
  %863 = vdwg.mxu0
  %864 = vmatprep.subr.bf16.mxu0 %v652
  %865 = vmatpush1.bf16.msra.mxu0 %v651
  %866 = vmatprep.subr.bf16.mxu0 %v648
  %867 = vmatpush1.bf16.msra.mxu0 %v647
  %868 = vmatprep.subr.bf16.mxu0 %v644
  %869 = vmatpush1.bf16.msra.mxu0 %v643
  %870 = vmatprep.subr.bf16.mxu0 %v640
  %871 = vmatpush1.bf16.msra.mxu0 %v639
  %872 = vmatprep.subr.bf16.mxu0 %v636
  %873 = vmatpush1.bf16.msra.mxu0 %v635
  %874 = vmatprep.subr.bf16.mxu0 %v632
  %875 = vmatpush1.bf16.msra.mxu0 %v631
  %876 = vmatprep.subr.bf16.mxu0 %v628
  %877 = vmatpush1.bf16.msra.mxu0 %v627
  %878 = vmatprep.subr.bf16.mxu0 %v624
  %879 = vmatpush1.bf16.msra.mxu0 %v623
  %880 = vmatprep.subr.bf16.mxu0 0
  %881 = vmatpush2.bf16.msra.mxu0 0
  %882 = vmatprep.subr.bf16.mxu0 0
  %883 = vmatpush2.bf16.msra.mxu0 0
  %884 = vmatprep.subr.bf16.mxu0 0
  %885 = vmatpush2.bf16.msra.mxu0 0
  %886 = vmatprep.subr.bf16.mxu0 0
  %887 = vmatpush2.bf16.msra.mxu0 0
  %888 = vmatprep.subr.bf16.mxu0 0
  %889 = vmatpush2.bf16.msra.mxu0 0
  %890 = vmatprep.subr.bf16.mxu0 0
  %891 = vmatpush2.bf16.msra.mxu0 0
  %892 = vmatprep.subr.bf16.mxu0 0
  %893 = vmatpush2.bf16.msra.mxu0 0
  %894 = vmatprep.subr.bf16.mxu0 0
  %895 = vmatpush2.bf16.msra.mxu0 0
  %896 = vmatprep.mubr.bf16.mxu0 0
  %897 = vmatmul.mubr.bf16.gmra.mxu0 %v225
  %v898 = vpop.f32.mrf.mxu0
  %v899 = vadd.f32 %v786, %v898
  %v900 = vpop.f32.mrf.mxu0
  %v901 = vadd.f32 %v788, %v900
  %v902 = vpop.f32.mrf.mxu0
  %v903 = vadd.f32 %v790, %v902
  %v904 = vpop.f32.mrf.mxu0
  %v905 = vadd.f32 %v792, %v904
  %906 = vmatprep.mubr.bf16.mxu0 0
  %907 = vmatmul.mubr.bf16.gmra.mxu0 %v228
  %v908 = vpop.f32.mrf.mxu0
  %v909 = vadd.f32 %v796, %v908
  %v910 = vpop.f32.mrf.mxu0
  %v911 = vadd.f32 %v798, %v910
  %v912 = vpop.f32.mrf.mxu0
  %v913 = vadd.f32 %v800, %v912
  %v914 = vpop.f32.mrf.mxu0
  %v915 = vadd.f32 %v802, %v914
  %916 = vmatprep.mubr.bf16.mxu0 0
  %917 = vmatmul.mubr.bf16.gmra.mxu0 %v231
  %v918 = vpop.f32.mrf.mxu0
  %v919 = vadd.f32 %v806, %v918
  %v920 = vpop.f32.mrf.mxu0
  %v921 = vadd.f32 %v808, %v920
  %v922 = vpop.f32.mrf.mxu0
  %v923 = vadd.f32 %v810, %v922
  %v924 = vpop.f32.mrf.mxu0
  %v925 = vadd.f32 %v812, %v924
  %926 = vmatprep.mubr.bf16.mxu0 0
  %927 = vmatmul.mubr.bf16.gmra.mxu0 %v234
  %v928 = vpop.f32.mrf.mxu0
  %v929 = vadd.f32 %v816, %v928
  %v930 = vpop.f32.mrf.mxu0
  %v931 = vadd.f32 %v818, %v930
  %v932 = vpop.f32.mrf.mxu0
  %v933 = vadd.f32 %v820, %v932
  %v934 = vpop.f32.mrf.mxu0
  %v935 = vadd.f32 %v822, %v934
  %936 = vmatprep.mubr.bf16.mxu0 0
  %937 = vmatmul.mubr.bf16.gmra.mxu0 %v237
  %v938 = vpop.f32.mrf.mxu0
  %v939 = vadd.f32 %v826, %v938
  %v940 = vpop.f32.mrf.mxu0
  %v941 = vadd.f32 %v828, %v940
  %v942 = vpop.f32.mrf.mxu0
  %v943 = vadd.f32 %v830, %v942
  %v944 = vpop.f32.mrf.mxu0
  %v945 = vadd.f32 %v832, %v944
  %946 = vmatprep.mubr.bf16.mxu0 0
  %947 = vmatmul.mubr.bf16.gmra.mxu0 %v240
  %v948 = vpop.f32.mrf.mxu0
  %v949 = vadd.f32 %v836, %v948
  %v950 = vpop.f32.mrf.mxu0
  %v951 = vadd.f32 %v838, %v950
  %v952 = vpop.f32.mrf.mxu0
  %v953 = vadd.f32 %v840, %v952
  %v954 = vpop.f32.mrf.mxu0
  %v955 = vadd.f32 %v842, %v954
  %956 = vmatprep.mubr.bf16.mxu0 0
  %957 = vmatmul.mubr.bf16.gmra.mxu0 %v243
  %v958 = vpop.f32.mrf.mxu0
  %v959 = vadd.f32 %v846, %v958
  %v960 = vpop.f32.mrf.mxu0
  %v961 = vadd.f32 %v848, %v960
  %v962 = vpop.f32.mrf.mxu0
  %v963 = vadd.f32 %v850, %v962
  %v964 = vpop.f32.mrf.mxu0
  %v965 = vadd.f32 %v852, %v964
  %966 = vmatprep.mubr.bf16.mxu0 0
  %967 = vmatmul.mubr.bf16.gmra.mxu0 %v246
  %v968 = vpop.f32.mrf.mxu0
  %v969 = vadd.f32 %v856, %v968
  %v970 = vpop.f32.mrf.mxu0
  %v971 = vadd.f32 %v858, %v970
  %v972 = vpop.f32.mrf.mxu0
  %v973 = vadd.f32 %v860, %v972
  %v974 = vpop.f32.mrf.mxu0
  %v975 = vadd.f32 %v862, %v974
  %976 = vdwg.mxu0
  %977 = vmatprep.subr.bf16.mxu0 %v590
  %978 = vmatpush1.bf16.msra.mxu0 %v589
  %979 = vmatprep.subr.bf16.mxu0 %v586
  %980 = vmatpush1.bf16.msra.mxu0 %v585
  %981 = vmatprep.subr.bf16.mxu0 %v582
  %982 = vmatpush1.bf16.msra.mxu0 %v581
  %983 = vmatprep.subr.bf16.mxu0 %v578
  %984 = vmatpush1.bf16.msra.mxu0 %v577
  %985 = vmatprep.subr.bf16.mxu0 %v574
  %986 = vmatpush1.bf16.msra.mxu0 %v573
  %987 = vmatprep.subr.bf16.mxu0 %v570
  %988 = vmatpush1.bf16.msra.mxu0 %v569
  %989 = vmatprep.subr.bf16.mxu0 %v566
  %990 = vmatpush1.bf16.msra.mxu0 %v565
  %991 = vmatprep.subr.bf16.mxu0 %v562
  %992 = vmatpush1.bf16.msra.mxu0 %v561
  %993 = vmatprep.subr.bf16.mxu0 %v622
  %994 = vmatpush2.bf16.msra.mxu0 %v621
  %995 = vmatprep.subr.bf16.mxu0 %v618
  %996 = vmatpush2.bf16.msra.mxu0 %v617
  %997 = vmatprep.subr.bf16.mxu0 %v614
  %998 = vmatpush2.bf16.msra.mxu0 %v613
  %999 = vmatprep.subr.bf16.mxu0 %v610
  %1000 = vmatpush2.bf16.msra.mxu0 %v609
  %1001 = vmatprep.subr.bf16.mxu0 %v606
  %1002 = vmatpush2.bf16.msra.mxu0 %v605
  %1003 = vmatprep.subr.bf16.mxu0 %v602
  %1004 = vmatpush2.bf16.msra.mxu0 %v601
  %1005 = vmatprep.subr.bf16.mxu0 %v598
  %1006 = vmatpush2.bf16.msra.mxu0 %v597
  %1007 = vmatprep.subr.bf16.mxu0 %v594
  %1008 = vmatpush2.bf16.msra.mxu0 %v593
  %1009 = vmatprep.mubr.bf16.mxu0 %v224
  %1010 = vmatmul.mubr.bf16.gmra.mxu0 %v223
  %v1011 = vpop.f32.mrf.mxu0
  %v1012 = vadd.f32 0.0, %v1011
  %v1013 = vpop.f32.mrf.mxu0
  %v1014 = vadd.f32 0.0, %v1013
  %v1015 = vpop.f32.mrf.mxu0
  %v1016 = vadd.f32 0.0, %v1015
  %v1017 = vpop.f32.mrf.mxu0
  %v1018 = vadd.f32 0.0, %v1017
  %1019 = vmatprep.mubr.bf16.mxu0 %v227
  %1020 = vmatmul.mubr.bf16.gmra.mxu0 %v226
  %v1021 = vpop.f32.mrf.mxu0
  %v1022 = vadd.f32 0.0, %v1021
  %v1023 = vpop.f32.mrf.mxu0
  %v1024 = vadd.f32 0.0, %v1023
  %v1025 = vpop.f32.mrf.mxu0
  %v1026 = vadd.f32 0.0, %v1025
  %v1027 = vpop.f32.mrf.mxu0
  %v1028 = vadd.f32 0.0, %v1027
  %1029 = vmatprep.mubr.bf16.mxu0 %v230
  %1030 = vmatmul.mubr.bf16.gmra.mxu0 %v229
  %v1031 = vpop.f32.mrf.mxu0
  %v1032 = vadd.f32 0.0, %v1031
  %v1033 = vpop.f32.mrf.mxu0
  %v1034 = vadd.f32 0.0, %v1033
  %v1035 = vpop.f32.mrf.mxu0
  %v1036 = vadd.f32 0.0, %v1035
  %v1037 = vpop.f32.mrf.mxu0
  %v1038 = vadd.f32 0.0, %v1037
  %1039 = vmatprep.mubr.bf16.mxu0 %v233
  %1040 = vmatmul.mubr.bf16.gmra.mxu0 %v232
  %v1041 = vpop.f32.mrf.mxu0
  %v1042 = vadd.f32 0.0, %v1041
  %v1043 = vpop.f32.mrf.mxu0
  %v1044 = vadd.f32 0.0, %v1043
  %v1045 = vpop.f32.mrf.mxu0
  %v1046 = vadd.f32 0.0, %v1045
  %v1047 = vpop.f32.mrf.mxu0
  %v1048 = vadd.f32 0.0, %v1047
  %1049 = vmatprep.mubr.bf16.mxu0 %v236
  %1050 = vmatmul.mubr.bf16.gmra.mxu0 %v235
  %v1051 = vpop.f32.mrf.mxu0
  %v1052 = vadd.f32 0.0, %v1051
  %v1053 = vpop.f32.mrf.mxu0
  %v1054 = vadd.f32 0.0, %v1053
  %v1055 = vpop.f32.mrf.mxu0
  %v1056 = vadd.f32 0.0, %v1055
  %v1057 = vpop.f32.mrf.mxu0
  %v1058 = vadd.f32 0.0, %v1057
  %1059 = vmatprep.mubr.bf16.mxu0 %v239
  %1060 = vmatmul.mubr.bf16.gmra.mxu0 %v238
  %v1061 = vpop.f32.mrf.mxu0
  %v1062 = vadd.f32 0.0, %v1061
  %v1063 = vpop.f32.mrf.mxu0
  %v1064 = vadd.f32 0.0, %v1063
  %v1065 = vpop.f32.mrf.mxu0
  %v1066 = vadd.f32 0.0, %v1065
  %v1067 = vpop.f32.mrf.mxu0
  %v1068 = vadd.f32 0.0, %v1067
  %1069 = vmatprep.mubr.bf16.mxu0 %v242
  %1070 = vmatmul.mubr.bf16.gmra.mxu0 %v241
  %v1071 = vpop.f32.mrf.mxu0
  %v1072 = vadd.f32 0.0, %v1071
  %v1073 = vpop.f32.mrf.mxu0
  %v1074 = vadd.f32 0.0, %v1073
  %v1075 = vpop.f32.mrf.mxu0
  %v1076 = vadd.f32 0.0, %v1075
  %v1077 = vpop.f32.mrf.mxu0
  %v1078 = vadd.f32 0.0, %v1077
  %1079 = vmatprep.mubr.bf16.mxu0 %v245
  %1080 = vmatmul.mubr.bf16.gmra.mxu0 %v244
  %v1081 = vpop.f32.mrf.mxu0
  %v1082 = vadd.f32 0.0, %v1081
  %v1083 = vpop.f32.mrf.mxu0
  %v1084 = vadd.f32 0.0, %v1083
  %v1085 = vpop.f32.mrf.mxu0
  %v1086 = vadd.f32 0.0, %v1085
  %v1087 = vpop.f32.mrf.mxu0
  %v1088 = vadd.f32 0.0, %v1087
  %1089 = vdwg.mxu0
  %1090 = vmatprep.subr.bf16.mxu0 %v654
  %1091 = vmatpush1.bf16.msra.mxu0 %v653
  %1092 = vmatprep.subr.bf16.mxu0 %v650
  %1093 = vmatpush1.bf16.msra.mxu0 %v649
  %1094 = vmatprep.subr.bf16.mxu0 %v646
  %1095 = vmatpush1.bf16.msra.mxu0 %v645
  %1096 = vmatprep.subr.bf16.mxu0 %v642
  %1097 = vmatpush1.bf16.msra.mxu0 %v641
  %1098 = vmatprep.subr.bf16.mxu0 %v638
  %1099 = vmatpush1.bf16.msra.mxu0 %v637
  %1100 = vmatprep.subr.bf16.mxu0 %v634
  %1101 = vmatpush1.bf16.msra.mxu0 %v633
  %1102 = vmatprep.subr.bf16.mxu0 %v630
  %1103 = vmatpush1.bf16.msra.mxu0 %v629
  %1104 = vmatprep.subr.bf16.mxu0 %v626
  %1105 = vmatpush1.bf16.msra.mxu0 %v625
  %1106 = vmatprep.subr.bf16.mxu0 0
  %1107 = vmatpush2.bf16.msra.mxu0 0
  %1108 = vmatprep.subr.bf16.mxu0 0
  %1109 = vmatpush2.bf16.msra.mxu0 0
  %1110 = vmatprep.subr.bf16.mxu0 0
  %1111 = vmatpush2.bf16.msra.mxu0 0
  %1112 = vmatprep.subr.bf16.mxu0 0
  %1113 = vmatpush2.bf16.msra.mxu0 0
  %1114 = vmatprep.subr.bf16.mxu0 0
  %1115 = vmatpush2.bf16.msra.mxu0 0
  %1116 = vmatprep.subr.bf16.mxu0 0
  %1117 = vmatpush2.bf16.msra.mxu0 0
  %1118 = vmatprep.subr.bf16.mxu0 0
  %1119 = vmatpush2.bf16.msra.mxu0 0
  %1120 = vmatprep.subr.bf16.mxu0 0
  %1121 = vmatpush2.bf16.msra.mxu0 0
  %1122 = vmatprep.mubr.bf16.mxu0 0
  %1123 = vmatmul.mubr.bf16.gmra.mxu0 %v225
  %v1124 = vpop.f32.mrf.mxu0
  %v1125 = vadd.f32 %v1012, %v1124
  %v1126 = vpop.f32.mrf.mxu0
  %v1127 = vadd.f32 %v1014, %v1126
  %v1128 = vpop.f32.mrf.mxu0
  %v1129 = vadd.f32 %v1016, %v1128
  %v1130 = vpop.f32.mrf.mxu0
  %v1131 = vadd.f32 %v1018, %v1130
  %1132 = vmatprep.mubr.bf16.mxu0 0
  %1133 = vmatmul.mubr.bf16.gmra.mxu0 %v228
  %v1134 = vpop.f32.mrf.mxu0
  %v1135 = vadd.f32 %v1022, %v1134
  %v1136 = vpop.f32.mrf.mxu0
  %v1137 = vadd.f32 %v1024, %v1136
  %v1138 = vpop.f32.mrf.mxu0
  %v1139 = vadd.f32 %v1026, %v1138
  %v1140 = vpop.f32.mrf.mxu0
  %v1141 = vadd.f32 %v1028, %v1140
  %1142 = vmatprep.mubr.bf16.mxu0 0
  %1143 = vmatmul.mubr.bf16.gmra.mxu0 %v231
  %v1144 = vpop.f32.mrf.mxu0
  %v1145 = vadd.f32 %v1032, %v1144
  %v1146 = vpop.f32.mrf.mxu0
  %v1147 = vadd.f32 %v1034, %v1146
  %v1148 = vpop.f32.mrf.mxu0
  %v1149 = vadd.f32 %v1036, %v1148
  %v1150 = vpop.f32.mrf.mxu0
  %v1151 = vadd.f32 %v1038, %v1150
  %1152 = vmatprep.mubr.bf16.mxu0 0
  %1153 = vmatmul.mubr.bf16.gmra.mxu0 %v234
  %v1154 = vpop.f32.mrf.mxu0
  %v1155 = vadd.f32 %v1042, %v1154
  %v1156 = vpop.f32.mrf.mxu0
  %v1157 = vadd.f32 %v1044, %v1156
  %v1158 = vpop.f32.mrf.mxu0
  %v1159 = vadd.f32 %v1046, %v1158
  %v1160 = vpop.f32.mrf.mxu0
  %v1161 = vadd.f32 %v1048, %v1160
  %1162 = vmatprep.mubr.bf16.mxu0 0
  %1163 = vmatmul.mubr.bf16.gmra.mxu0 %v237
  %v1164 = vpop.f32.mrf.mxu0
  %v1165 = vadd.f32 %v1052, %v1164
  %v1166 = vpop.f32.mrf.mxu0
  %v1167 = vadd.f32 %v1054, %v1166
  %v1168 = vpop.f32.mrf.mxu0
  %v1169 = vadd.f32 %v1056, %v1168
  %v1170 = vpop.f32.mrf.mxu0
  %v1171 = vadd.f32 %v1058, %v1170
  %1172 = vmatprep.mubr.bf16.mxu0 0
  %1173 = vmatmul.mubr.bf16.gmra.mxu0 %v240
  %v1174 = vpop.f32.mrf.mxu0
  %v1175 = vadd.f32 %v1062, %v1174
  %v1176 = vpop.f32.mrf.mxu0
  %v1177 = vadd.f32 %v1064, %v1176
  %v1178 = vpop.f32.mrf.mxu0
  %v1179 = vadd.f32 %v1066, %v1178
  %v1180 = vpop.f32.mrf.mxu0
  %v1181 = vadd.f32 %v1068, %v1180
  %1182 = vmatprep.mubr.bf16.mxu0 0
  %1183 = vmatmul.mubr.bf16.gmra.mxu0 %v243
  %v1184 = vpop.f32.mrf.mxu0
  %v1185 = vadd.f32 %v1072, %v1184
  %v1186 = vpop.f32.mrf.mxu0
  %v1187 = vadd.f32 %v1074, %v1186
  %v1188 = vpop.f32.mrf.mxu0
  %v1189 = vadd.f32 %v1076, %v1188
  %v1190 = vpop.f32.mrf.mxu0
  %v1191 = vadd.f32 %v1078, %v1190
  %1192 = vmatprep.mubr.bf16.mxu0 0
  %1193 = vmatmul.mubr.bf16.gmra.mxu0 %v246
  %v1194 = vpop.f32.mrf.mxu0
  %v1195 = vadd.f32 %v1082, %v1194
  %v1196 = vpop.f32.mrf.mxu0
  %v1197 = vadd.f32 %v1084, %v1196
  %v1198 = vpop.f32.mrf.mxu0
  %v1199 = vadd.f32 %v1086, %v1198
  %v1200 = vpop.f32.mrf.mxu0
  %v1201 = vadd.f32 %v1088, %v1200
  %1202 = vdwg.mxu0
  %v1203 = vmul.f32 %v899, 0.5
  %v1204 = vmul.f32 %v901, 0.5
  %v1205 = vmul.f32 %v1125, 0.5
  %v1206 = vmul.f32 %v1127, 0.5
  %v1207 = vmul.f32 %v903, 0.5
  %v1208 = vmul.f32 %v905, 0.5
  %v1209 = vmul.f32 %v1129, 0.5
  %v1210 = vmul.f32 %v1131, 0.5
  %v1211 = vmul.f32 %v909, 0.5
  %v1212 = vmul.f32 %v911, 0.5
  %v1213 = vmul.f32 %v1135, 0.5
  %v1214 = vmul.f32 %v1137, 0.5
  %v1215 = vmul.f32 %v913, 0.5
  %v1216 = vmul.f32 %v915, 0.5
  %v1217 = vmul.f32 %v1139, 0.5
  %v1218 = vmul.f32 %v1141, 0.5
  %v1219 = vtanh.pop %v1203
  %v1220 = vtanh.pop %v1204
  %v1221 = vtanh.pop %v1205
  %v1222 = vtanh.pop %v1206
  %v1223 = vtanh.pop %v1207
  %v1224 = vtanh.pop %v1208
  %v1225 = vtanh.pop %v1209
  %v1226 = vtanh.pop %v1210
  %v1227 = vtanh.pop %v1211
  %v1228 = vtanh.pop %v1212
  %v1229 = vtanh.pop %v1213
  %v1230 = vtanh.pop %v1214
  %v1231 = vtanh.pop %v1215
  %v1232 = vtanh.pop %v1216
  %v1233 = vtanh.pop %v1217
  %v1234 = vtanh.pop %v1218
  %v1235 = vmul.f32 %v1219, 0.5
  %v1236 = vmul.f32 %v1220, 0.5
  %v1237 = vmul.f32 %v1221, 0.5
  %v1238 = vmul.f32 %v1222, 0.5
  %v1239 = vmul.f32 %v1223, 0.5
  %v1240 = vmul.f32 %v1224, 0.5
  %v1241 = vmul.f32 %v1225, 0.5
  %v1242 = vmul.f32 %v1226, 0.5
  %v1243 = vmul.f32 %v1227, 0.5
  %v1244 = vmul.f32 %v1228, 0.5
  %v1245 = vmul.f32 %v1229, 0.5
  %v1246 = vmul.f32 %v1230, 0.5
  %v1247 = vmul.f32 %v1231, 0.5
  %v1248 = vmul.f32 %v1232, 0.5
  %v1249 = vmul.f32 %v1233, 0.5
  %v1250 = vmul.f32 %v1234, 0.5
  %v1251 = vadd.f32 %v1235, 0.5
  %v1252 = vadd.f32 %v1236, 0.5
  %v1253 = vadd.f32 %v1237, 0.5
  %v1254 = vadd.f32 %v1238, 0.5
  %v1255 = vadd.f32 %v1239, 0.5
  %v1256 = vadd.f32 %v1240, 0.5
  %v1257 = vadd.f32 %v1241, 0.5
  %v1258 = vadd.f32 %v1242, 0.5
  %v1259 = vadd.f32 %v1243, 0.5
  %v1260 = vadd.f32 %v1244, 0.5
  %v1261 = vadd.f32 %v1245, 0.5
  %v1262 = vadd.f32 %v1246, 0.5
  %v1263 = vadd.f32 %v1247, 0.5
  %v1264 = vadd.f32 %v1248, 0.5
  %v1265 = vadd.f32 %v1249, 0.5
  %v1266 = vadd.f32 %v1250, 0.5
  %v1267 = vmul.f32 %v919, 0.5
  %v1268 = vmul.f32 %v921, 0.5
  %v1269 = vmul.f32 %v1145, 0.5
  %v1270 = vmul.f32 %v1147, 0.5
  %v1271 = vmul.f32 %v923, 0.5
  %v1272 = vmul.f32 %v925, 0.5
  %v1273 = vmul.f32 %v1149, 0.5
  %v1274 = vmul.f32 %v1151, 0.5
  %v1275 = vmul.f32 %v929, 0.5
  %v1276 = vmul.f32 %v931, 0.5
  %v1277 = vmul.f32 %v1155, 0.5
  %v1278 = vmul.f32 %v1157, 0.5
  %v1279 = vmul.f32 %v933, 0.5
  %v1280 = vmul.f32 %v935, 0.5
  %v1281 = vmul.f32 %v1159, 0.5
  %v1282 = vmul.f32 %v1161, 0.5
  %v1283 = vtanh.pop %v1267
  %v1284 = vtanh.pop %v1268
  %v1285 = vtanh.pop %v1269
  %v1286 = vtanh.pop %v1270
  %v1287 = vtanh.pop %v1271
  %v1288 = vtanh.pop %v1272
  %v1289 = vtanh.pop %v1273
  %v1290 = vtanh.pop %v1274
  %v1291 = vtanh.pop %v1275
  %v1292 = vtanh.pop %v1276
  %v1293 = vtanh.pop %v1277
  %v1294 = vtanh.pop %v1278
  %v1295 = vtanh.pop %v1279
  %v1296 = vtanh.pop %v1280
  %v1297 = vtanh.pop %v1281
  %v1298 = vtanh.pop %v1282
  %v1299 = vmul.f32 %v1283, 0.5
  %v1300 = vmul.f32 %v1284, 0.5
  %v1301 = vmul.f32 %v1285, 0.5
  %v1302 = vmul.f32 %v1286, 0.5
  %v1303 = vmul.f32 %v1287, 0.5
  %v1304 = vmul.f32 %v1288, 0.5
  %v1305 = vmul.f32 %v1289, 0.5
  %v1306 = vmul.f32 %v1290, 0.5
  %v1307 = vmul.f32 %v1291, 0.5
  %v1308 = vmul.f32 %v1292, 0.5
  %v1309 = vmul.f32 %v1293, 0.5
  %v1310 = vmul.f32 %v1294, 0.5
  %v1311 = vmul.f32 %v1295, 0.5
  %v1312 = vmul.f32 %v1296, 0.5
  %v1313 = vmul.f32 %v1297, 0.5
  %v1314 = vmul.f32 %v1298, 0.5
  %v1315 = vadd.f32 %v1299, 0.5
  %v1316 = vadd.f32 %v1300, 0.5
  %v1317 = vadd.f32 %v1301, 0.5
  %v1318 = vadd.f32 %v1302, 0.5
  %v1319 = vadd.f32 %v1303, 0.5
  %v1320 = vadd.f32 %v1304, 0.5
  %v1321 = vadd.f32 %v1305, 0.5
  %v1322 = vadd.f32 %v1306, 0.5
  %v1323 = vadd.f32 %v1307, 0.5
  %v1324 = vadd.f32 %v1308, 0.5
  %v1325 = vadd.f32 %v1309, 0.5
  %v1326 = vadd.f32 %v1310, 0.5
  %v1327 = vadd.f32 %v1311, 0.5
  %v1328 = vadd.f32 %v1312, 0.5
  %v1329 = vadd.f32 %v1313, 0.5
  %v1330 = vadd.f32 %v1314, 0.5
  %v1331 = vmul.f32 %v939, 0.5
  %v1332 = vmul.f32 %v941, 0.5
  %v1333 = vmul.f32 %v1165, 0.5
  %v1334 = vmul.f32 %v1167, 0.5
  %v1335 = vmul.f32 %v943, 0.5
  %v1336 = vmul.f32 %v945, 0.5
  %v1337 = vmul.f32 %v1169, 0.5
  %v1338 = vmul.f32 %v1171, 0.5
  %v1339 = vmul.f32 %v949, 0.5
  %v1340 = vmul.f32 %v951, 0.5
  %v1341 = vmul.f32 %v1175, 0.5
  %v1342 = vmul.f32 %v1177, 0.5
  %v1343 = vmul.f32 %v953, 0.5
  %v1344 = vmul.f32 %v955, 0.5
  %v1345 = vmul.f32 %v1179, 0.5
  %v1346 = vmul.f32 %v1181, 0.5
  %v1347 = vtanh.pop %v1331
  %v1348 = vtanh.pop %v1332
  %v1349 = vtanh.pop %v1333
  %v1350 = vtanh.pop %v1334
  %v1351 = vtanh.pop %v1335
  %v1352 = vtanh.pop %v1336
  %v1353 = vtanh.pop %v1337
  %v1354 = vtanh.pop %v1338
  %v1355 = vtanh.pop %v1339
  %v1356 = vtanh.pop %v1340
  %v1357 = vtanh.pop %v1341
  %v1358 = vtanh.pop %v1342
  %v1359 = vtanh.pop %v1343
  %v1360 = vtanh.pop %v1344
  %v1361 = vtanh.pop %v1345
  %v1362 = vtanh.pop %v1346
  %v1363 = vmul.f32 %v1347, 0.5
  %v1364 = vmul.f32 %v1348, 0.5
  %v1365 = vmul.f32 %v1349, 0.5
  %v1366 = vmul.f32 %v1350, 0.5
  %v1367 = vmul.f32 %v1351, 0.5
  %v1368 = vmul.f32 %v1352, 0.5
  %v1369 = vmul.f32 %v1353, 0.5
  %v1370 = vmul.f32 %v1354, 0.5
  %v1371 = vmul.f32 %v1355, 0.5
  %v1372 = vmul.f32 %v1356, 0.5
  %v1373 = vmul.f32 %v1357, 0.5
  %v1374 = vmul.f32 %v1358, 0.5
  %v1375 = vmul.f32 %v1359, 0.5
  %v1376 = vmul.f32 %v1360, 0.5
  %v1377 = vmul.f32 %v1361, 0.5
  %v1378 = vmul.f32 %v1362, 0.5
  %v1379 = vadd.f32 %v1363, 0.5
  %v1380 = vadd.f32 %v1364, 0.5
  %v1381 = vadd.f32 %v1365, 0.5
  %v1382 = vadd.f32 %v1366, 0.5
  %v1383 = vadd.f32 %v1367, 0.5
  %v1384 = vadd.f32 %v1368, 0.5
  %v1385 = vadd.f32 %v1369, 0.5
  %v1386 = vadd.f32 %v1370, 0.5
  %v1387 = vadd.f32 %v1371, 0.5
  %v1388 = vadd.f32 %v1372, 0.5
  %v1389 = vadd.f32 %v1373, 0.5
  %v1390 = vadd.f32 %v1374, 0.5
  %v1391 = vadd.f32 %v1375, 0.5
  %v1392 = vadd.f32 %v1376, 0.5
  %v1393 = vadd.f32 %v1377, 0.5
  %v1394 = vadd.f32 %v1378, 0.5
  %v1395 = vtanh.pop %v959
  %v1396 = vtanh.pop %v961
  %v1397 = vtanh.pop %v1185
  %v1398 = vtanh.pop %v1187
  %v1399 = vtanh.pop %v963
  %v1400 = vtanh.pop %v965
  %v1401 = vtanh.pop %v1189
  %v1402 = vtanh.pop %v1191
  %v1403 = vtanh.pop %v969
  %v1404 = vtanh.pop %v971
  %v1405 = vtanh.pop %v1195
  %v1406 = vtanh.pop %v1197
  %v1407 = vtanh.pop %v973
  %v1408 = vtanh.pop %v975
  %v1409 = vtanh.pop %v1199
  %v1410 = vtanh.pop %v1201
  %v1411 = vld [vmem:[%s2] sm:$0xff]
  %v1412 = vld [vmem:[%s2 + $0x8] sm:$0xff]
  %v1413 = vld [vmem:[%s2 + $0x10] sm:$0xff]
  %v1414 = vld [vmem:[%s2 + $0x18] sm:$0xff]
  %v1415 = vld [vmem:[%s2 + $0x20] sm:$0xff]
  %v1416 = vld [vmem:[%s2 + $0x28] sm:$0xff]
  %v1417 = vld [vmem:[%s2 + $0x30] sm:$0xff]
  %v1418 = vld [vmem:[%s2 + $0x38] sm:$0xff]
  %v1419 = vld [vmem:[%s2 + $0x40] sm:$0xff]
  %v1420 = vld [vmem:[%s2 + $0x48] sm:$0xff]
  %v1421 = vld [vmem:[%s2 + $0x50] sm:$0xff]
  %v1422 = vld [vmem:[%s2 + $0x58] sm:$0xff]
  %v1423 = vld [vmem:[%s2 + $0x60] sm:$0xff]
  %v1424 = vld [vmem:[%s2 + $0x68] sm:$0xff]
  %v1425 = vld [vmem:[%s2 + $0x70] sm:$0xff]
  %v1426 = vld [vmem:[%s2 + $0x78] sm:$0xff]
  %v1427 = vmul.f32 %v1315, %v1411
  %v1428 = vmul.f32 %v1316, %v1412
  %v1429 = vmul.f32 %v1317, %v1413
  %v1430 = vmul.f32 %v1318, %v1414
  %v1431 = vmul.f32 %v1319, %v1415
  %v1432 = vmul.f32 %v1320, %v1416
  %v1433 = vmul.f32 %v1321, %v1417
  %v1434 = vmul.f32 %v1322, %v1418
  %v1435 = vmul.f32 %v1323, %v1419
  %v1436 = vmul.f32 %v1324, %v1420
  %v1437 = vmul.f32 %v1325, %v1421
  %v1438 = vmul.f32 %v1326, %v1422
  %v1439 = vmul.f32 %v1327, %v1423
  %v1440 = vmul.f32 %v1328, %v1424
  %v1441 = vmul.f32 %v1329, %v1425
  %v1442 = vmul.f32 %v1330, %v1426
  %v1443 = vmul.f32 %v1251, %v1395
  %v1444 = vmul.f32 %v1252, %v1396
  %v1445 = vmul.f32 %v1253, %v1397
  %v1446 = vmul.f32 %v1254, %v1398
  %v1447 = vmul.f32 %v1255, %v1399
  %v1448 = vmul.f32 %v1256, %v1400
  %v1449 = vmul.f32 %v1257, %v1401
  %v1450 = vmul.f32 %v1258, %v1402
  %v1451 = vmul.f32 %v1259, %v1403
  %v1452 = vmul.f32 %v1260, %v1404
  %v1453 = vmul.f32 %v1261, %v1405
  %v1454 = vmul.f32 %v1262, %v1406
  %v1455 = vmul.f32 %v1263, %v1407
  %v1456 = vmul.f32 %v1264, %v1408
  %v1457 = vmul.f32 %v1265, %v1409
  %v1458 = vmul.f32 %v1266, %v1410
  %v1459 = vadd.f32 %v1427, %v1443
  %v1460 = vadd.f32 %v1428, %v1444
  %v1461 = vadd.f32 %v1429, %v1445
  %v1462 = vadd.f32 %v1430, %v1446
  %v1463 = vadd.f32 %v1431, %v1447
  %v1464 = vadd.f32 %v1432, %v1448
  %v1465 = vadd.f32 %v1433, %v1449
  %v1466 = vadd.f32 %v1434, %v1450
  %v1467 = vadd.f32 %v1435, %v1451
  %v1468 = vadd.f32 %v1436, %v1452
  %v1469 = vadd.f32 %v1437, %v1453
  %v1470 = vadd.f32 %v1438, %v1454
  %v1471 = vadd.f32 %v1439, %v1455
  %v1472 = vadd.f32 %v1440, %v1456
  %v1473 = vadd.f32 %v1441, %v1457
  %v1474 = vadd.f32 %v1442, %v1458
  %v1475 = vtanh.pop %v1459
  %v1476 = vtanh.pop %v1460
  %v1477 = vtanh.pop %v1461
  %v1478 = vtanh.pop %v1462
  %v1479 = vtanh.pop %v1463
  %v1480 = vtanh.pop %v1464
  %v1481 = vtanh.pop %v1465
  %v1482 = vtanh.pop %v1466
  %v1483 = vtanh.pop %v1467
  %v1484 = vtanh.pop %v1468
  %v1485 = vtanh.pop %v1469
  %v1486 = vtanh.pop %v1470
  %v1487 = vtanh.pop %v1471
  %v1488 = vtanh.pop %v1472
  %v1489 = vtanh.pop %v1473
  %v1490 = vtanh.pop %v1474
  %v1491 = vmul.f32 %v1379, %v1475
  %v1492 = vmul.f32 %v1380, %v1476
  %v1493 = vmul.f32 %v1381, %v1477
  %v1494 = vmul.f32 %v1382, %v1478
  %v1495 = vmul.f32 %v1383, %v1479
  %v1496 = vmul.f32 %v1384, %v1480
  %v1497 = vmul.f32 %v1385, %v1481
  %v1498 = vmul.f32 %v1386, %v1482
  %v1499 = vmul.f32 %v1387, %v1483
  %v1500 = vmul.f32 %v1388, %v1484
  %v1501 = vmul.f32 %v1389, %v1485
  %v1502 = vmul.f32 %v1390, %v1486
  %v1503 = vmul.f32 %v1391, %v1487
  %v1504 = vmul.f32 %v1392, %v1488
  %v1505 = vmul.f32 %v1393, %v1489
  %v1506 = vmul.f32 %v1394, %v1490
  %1507 = vst [vmem:[%s3] sm:$0xff] %v1491
  %1508 = vst [vmem:[%s3 + $0x8] sm:$0xff] %v1492
  %1509 = vst [vmem:[%s3 + $0x10] sm:$0xff] %v1493
  %1510 = vst [vmem:[%s3 + $0x18] sm:$0xff] %v1494
  %1511 = vst [vmem:[%s3 + $0x20] sm:$0xff] %v1495
  %1512 = vst [vmem:[%s3 + $0x28] sm:$0xff] %v1496
  %1513 = vst [vmem:[%s3 + $0x30] sm:$0xff] %v1497
  %1514 = vst [vmem:[%s3 + $0x38] sm:$0xff] %v1498
  %1515 = vst [vmem:[%s3 + $0x40] sm:$0xff] %v1499
  %1516 = vst [vmem:[%s3 + $0x48] sm:$0xff] %v1500
  %1517 = vst [vmem:[%s3 + $0x50] sm:$0xff] %v1501
  %1518 = vst [vmem:[%s3 + $0x58] sm:$0xff] %v1502
  %1519 = vst [vmem:[%s3 + $0x60] sm:$0xff] %v1503
  %1520 = vst [vmem:[%s3 + $0x68] sm:$0xff] %v1504
  %1521 = vst [vmem:[%s3 + $0x70] sm:$0xff] %v1505
  %1522 = vst [vmem:[%s3 + $0x78] sm:$0xff] %v1506
  %1523 = vst [vmem:[%s3 + $0x80] sm:$0xff] %v1459
  %1524 = vst [vmem:[%s3 + $0x88] sm:$0xff] %v1460
  %1525 = vst [vmem:[%s3 + $0x90] sm:$0xff] %v1461
  %1526 = vst [vmem:[%s3 + $0x98] sm:$0xff] %v1462
  %1527 = vst [vmem:[%s3 + $0xa0] sm:$0xff] %v1463
  %1528 = vst [vmem:[%s3 + $0xa8] sm:$0xff] %v1464
  %1529 = vst [vmem:[%s3 + $0xb0] sm:$0xff] %v1465
  %1530 = vst [vmem:[%s3 + $0xb8] sm:$0xff] %v1466
  %1531 = vst [vmem:[%s3 + $0xc0] sm:$0xff] %v1467
  %1532 = vst [vmem:[%s3 + $0xc8] sm:$0xff] %v1468
  %1533 = vst [vmem:[%s3 + $0xd0] sm:$0xff] %v1469
  %1534 = vst [vmem:[%s3 + $0xd8] sm:$0xff] %v1470
  %1535 = vst [vmem:[%s3 + $0xe0] sm:$0xff] %v1471
  %1536 = vst [vmem:[%s3 + $0xe8] sm:$0xff] %v1472
  %1537 = vst [vmem:[%s3 + $0xf0] sm:$0xff] %v1473
  %1538 = vst [vmem:[%s3 + $0xf8] sm:$0xff] %v1474
  // Predicated region
  $region14: #{convlstm_cell_forward.1} parent=0 // pred_check
    _
  $region15: #{convlstm_cell_forward.1} parent=0 // pred_check_branch
    %1540 = sbr.rel (0) target = $region17
  $region16: #{convlstm_cell_forward.1} parent=0 // pred_region
    _
  $region17: #{convlstm_cell_forward.1} parent=0 // pred_fallthru
    _
  // Predicated region
  $region18: #{convlstm_cell_forward.1} parent=0 // pred_check
    _
  $region19: #{convlstm_cell_forward.1} parent=0 // pred_check_branch
    %1542 = sbr.rel (0) target = $region21
  $region20: #{convlstm_cell_forward.1} parent=0 // pred_region
    _
  $region21: #{convlstm_cell_forward.1} parent=0 // pred_fallthru
    _

</llo_original>
